<compile_context>
chip_gen: v7x
topology: tpu7x:2x2x1
jax: 0.10.0
libtpu: 0.0.40
codegen_flags: <defaults>
</compile_context>

<pallas_src>
import functools

import jax
import jax.numpy as jnp
from jax.experimental import pallas as pl
from jax.experimental.pallas import tpu as pltpu

_VMEM_LIMIT_BYTES = 48 * 1024 * 1024  # safe on v7x (64 MiB), a raise on v5e/v6e defaults.


# ------------------------------- helpers ------------------------------------

def _pick_col_tile(n, cap=1024):
    """Largest lane-dense (multiple-of-128) column tile <= cap that divides n, else full n."""
    if n <= cap:
        return n
    t = (cap // 128) * 128
    while t >= 128:
        if n % t == 0:
            return t
        t -= 128
    return n


def _pick_batch_tile(batch, seq, target_rows=512):
    """Largest Bb dividing `batch` with Bb*seq <= target_rows, keeping >= 2 grid steps
    along the batch axis when batch > 1 (so v7x megacore can split work)."""
    cap = max(1, target_rows // max(seq, 1))
    bb = 1
    for d in range(1, batch + 1):
        if batch % d == 0 and d <= cap:
            bb = d
    if bb == batch and batch > 1:
        for d in range(batch // 2, 0, -1):
            if batch % d == 0:
                bb = d
                break
    return bb


def _layernorm_f32(x, w, b, eps=1e-5):
    # Row-wise LayerNorm over last dim, biased variance (matches torch.nn.LayerNorm).
    mean = jnp.mean(x, axis=-1, keepdims=True)
    xc = x - mean
    var = jnp.mean(xc * xc, axis=-1, keepdims=True)
    return xc * jax.lax.rsqrt(var + eps) * w.astype(jnp.float32) + b.astype(jnp.float32)


def _stacked_layer_spec(shape):
    """BlockSpec selecting one layer's slice of a (L, ...) stacked weight.
    Its index_map depends only on the layer grid axis, so the NEXT layer's weights
    prefetch (double-buffer) while the current layer computes."""
    nd = len(shape)
    return pl.BlockSpec((1,) + tuple(shape[1:]),
                        lambda b, l, _nd=nd: (l,) + (0,) * (_nd - 1))


# ----------------------------- Pallas kernels --------------------------------

def _linear_bias_kernel(x_ref, w_ref, b_ref, o_ref):
    # o = x @ w + b       x:(M,K)  w:(K,tn)  b:(1,tn)
    acc = jnp.dot(x_ref[...].astype(w_ref.dtype), w_ref[...],
                  preferred_element_type=jnp.float32)
    o_ref[...] = (acc + b_ref[...].astype(jnp.float32)).astype(o_ref.dtype)


def _transformer_stack_kernel(x_ref,
                              ln1w_ref, ln1b_ref,
                              wq_ref, wkv_ref, wproj_ref, bproj_ref,
                              ln2w_ref, ln2b_ref,
                              w1_ref, b1_ref, w2_ref, b2_ref,
                              o_ref, acc_ref, *, num_heads, scale):
    """Grid = (batch tiles, layers).  Token block (Bb, T, D) is resident across the
    layer axis; activations are carried in the f32 scratch `acc_ref`."""
    layer = pl.program_id(1)
    n_layers = pl.num_programs(1)

    @pl.when(layer == 0)
    def _():
        acc_ref[...] = x_ref[...].astype(jnp.float32)

    x = acc_ref[...]                                   # (Bb, T, D) f32 carry
    Bb, T, D = x.shape
    Dh = D // num_heads
    wdt = wq_ref.dtype                                 # matmul operand dtype

    x2 = x.reshape(Bb * T, D)                          # flatten: fill MXU rows

    # ---- attention sublayer: x = x + proj(attn(LN1(x))) ----
    xn = _layernorm_f32(x2, ln1w_ref[0], ln1b_ref[0])
    xn_c = xn.astype(wdt)
    q = jnp.dot(xn_c, wq_ref[0], preferred_element_type=jnp.float32)      # (Bb*T, D)
    kv = jnp.dot(xn_c, wkv_ref[0], preferred_element_type=jnp.float32)    # (Bb*T, 2D)

    q3 = q.reshape(Bb, T, D)
    k3 = kv[:, :D].reshape(Bb, T, D)   # column layout (2, H, Dh) matches torch reshape
    v3 = kv[:, D:].reshape(Bb, T, D)

    heads = []
    for h in range(num_heads):                         # static unroll (H small)
        lo = h * Dh
        qh = q3[:, :, lo:lo + Dh]
        kh = k3[:, :, lo:lo + Dh]
        vh = v3[:, :, lo:lo + Dh]
        s = jnp.einsum('bnd,bmd->bnm', qh, kh,
                       preferred_element_type=jnp.float32) * scale        # (Bb, T, T)
        s = s - jnp.max(s, axis=-1, keepdims=True)
        p = jnp.exp(s)
        p = p * pl.reciprocal(jnp.sum(p, axis=-1, keepdims=True), approx=True)
        heads.append(jnp.einsum('bnm,bmd->bnd', p, vh,
                                preferred_element_type=jnp.float32))      # (Bb, T, Dh)
    attn = jnp.concatenate(heads, axis=-1).reshape(Bb * T, D)             # lane-dense

    proj = jnp.dot(attn.astype(wdt), wproj_ref[0],
                   preferred_element_type=jnp.float32) + bproj_ref[0].astype(jnp.float32)
    x1 = x2 + proj                                     # residual 1 (fused)

    # ---- MLP sublayer: x = x + fc2(relu(fc1(LN2(x)))) ----
    xn2 = _layernorm_f32(x1, ln2w_ref[0], ln2b_ref[0])
    hdn = jnp.dot(xn2.astype(wdt), w1_ref[0],
                  preferred_element_type=jnp.float32) + b1_ref[0].astype(jnp.float32)
    hdn = jnp.maximum(hdn, 0.0)
    mlp = jnp.dot(hdn.astype(wdt), w2_ref[0],
                  preferred_element_type=jnp.float32) + b2_ref[0].astype(jnp.float32)

    out = (x1 + mlp).reshape(Bb, T, D)                 # residual 2 (fused)
    acc_ref[...] = out

    @pl.when(layer == n_layers - 1)
    def _():
        o_ref[...] = out.astype(o_ref.dtype)


# ------------------------------ kernel wrappers ------------------------------

def linear_proj(x, w, b):
    """Entry projection: (B, dim_clip) @ (dim_clip, clip_length*D) + b, tiled over columns."""
    M, K = x.shape
    N = w.shape[1]
    tn = _pick_col_tile(N)
    return pl.pallas_call(
        _linear_bias_kernel,
        out_shape=jax.ShapeDtypeStruct((M, N), x.dtype),
        grid=(N // tn,),
        in_specs=[
            pl.BlockSpec((M, K), lambda j: (0, 0)),
            pl.BlockSpec((K, tn), lambda j: (0, j)),
            pl.BlockSpec((1, tn), lambda j: (0, j)),
        ],
        out_specs=pl.BlockSpec((M, tn), lambda j: (0, j)),
        compiler_params=pltpu.CompilerParams(
            dimension_semantics=("parallel",),
            vmem_limit_bytes=_VMEM_LIMIT_BYTES),
    )(x, w, b.reshape(1, N))


def transformer_stack(x, params, *, num_heads, scale):
    """All transformer layers fused in one pallas_call: grid = (B//Bb, num_layers)."""
    B, T, D = x.shape
    L = params["wq"].shape[0]
    Bb = _pick_batch_tile(B, T)

    tok_spec = pl.BlockSpec((Bb, T, D), lambda b, l: (b, 0, 0))
    weights = (params["ln1_w"], params["ln1_b"],
               params["wq"], params["wkv"], params["wproj"], params["bproj"],
               params["ln2_w"], params["ln2_b"],
               params["w1"], params["b1"], params["w2"], params["b2"])

    return pl.pallas_call(
        functools.partial(_transformer_stack_kernel, num_heads=num_heads, scale=scale),
        out_shape=jax.ShapeDtypeStruct((B, T, D), x.dtype),
        grid=(B // Bb, L),
        in_specs=[tok_spec] + [_stacked_layer_spec(w.shape) for w in weights],
        out_specs=tok_spec,
        scratch_shapes=[pltpu.VMEM((Bb, T, D), jnp.float32)],
        compiler_params=pltpu.CompilerParams(
            dimension_semantics=("parallel", "arbitrary"),
            vmem_limit_bytes=_VMEM_LIMIT_BYTES),
    )(x, *weights)


# ---------------------------- parameters / forward ---------------------------

def init_params(key, dim_clip, dim_embedding, prefix_length, clip_length,
                num_layers, num_heads=8, mlp_ratio=2.0, param_dtype=jnp.float32):
    """Per-layer weights are stacked along a leading (num_layers,) axis so the fused
    kernel can stream them layer by layer."""
    D = dim_embedding
    Hdim = int(D * mlp_ratio)
    L = num_layers
    keys = jax.random.split(key, 7)

    def w(k, shape):
        return (jax.random.normal(k, shape, jnp.float32) * 0.02).astype(param_dtype)

    return {
        "linear_w": w(keys[0], (dim_clip, clip_length * D)),
        "linear_b": jnp.zeros((clip_length * D,), jnp.float32),
        "prefix_const": jax.random.normal(keys[1], (prefix_length, D), jnp.float32),
        # TransformerLayer: to_queries / to_keys_values have bias=False; project/fc1/fc2 have bias.
        "ln1_w": jnp.ones((L, 1, D), jnp.float32), "ln1_b": jnp.zeros((L, 1, D), jnp.float32),
        "wq": w(keys[2], (L, D, D)),
        "wkv": w(keys[3], (L, D, 2 * D)),
        "wproj": w(keys[4], (L, D, D)),
        "bproj": jnp.zeros((L, 1, D), jnp.float32),
        "ln2_w": jnp.ones((L, 1, D), jnp.float32), "ln2_b": jnp.zeros((L, 1, D), jnp.float32),
        "w1": w(keys[5], (L, D, Hdim)), "b1": jnp.zeros((L, 1, Hdim), jnp.float32),
        "w2": w(keys[6], (L, Hdim, D)), "b2": jnp.zeros((L, 1, D), jnp.float32),
    }


def transformer_mapper_forward(params, x, clip_length, num_heads=8):
    B = x.shape[0]
    D = params["prefix_const"].shape[1]
    Dh = D // num_heads
    scale = Dh ** (-0.5)

    # self.linear(x).view(B, clip_length, -1), concat with broadcast prefix_const
    h = linear_proj(x, params["linear_w"], params["linear_b"]).reshape(B, clip_length, D)
    prefix = jnp.broadcast_to(params["prefix_const"][None],
                              (B,) + params["prefix_const"].shape)
    tokens = jnp.concatenate([h, prefix], axis=1)          # (B, T, D)

    out = transformer_stack(tokens, params, num_heads=num_heads, scale=scale)
    # out = transformer(prefix)[:, clip_length:]
    return out[:, clip_length:]


# -------------------------- pure-JAX reference (check) -----------------------

def reference_forward(params, x, clip_length, num_heads=8):
    B = x.shape[0]
    D = params["prefix_const"].shape[1]
    Dh = D // num_heads
    scale = Dh ** (-0.5)
    L = params["wq"].shape[0]

    def ln(z, w, b):
        mu = z.mean(-1, keepdims=True)
        var = ((z - mu) ** 2).mean(-1, keepdims=True)
        return (z - mu) / jnp.sqrt(var + 1e-5) * w + b

    h = (x @ params["linear_w"].astype(jnp.float32) + params["linear_b"]
         ).reshape(B, clip_length, D)
    prefix = jnp.broadcast_to(params["prefix_const"][None], (B,) + params["prefix_const"].shape)
    t = jnp.concatenate([h, prefix], axis=1)
    for l in range(L):
        xn = ln(t, params["ln1_w"][l, 0], params["ln1_b"][l, 0])
        q = (xn @ params["wq"][l].astype(jnp.float32)).reshape(B, -1, num_heads, Dh)
        kv = (xn @ params["wkv"][l].astype(jnp.float32)).reshape(B, -1, 2, num_heads, Dh)
        k, v = kv[:, :, 0], kv[:, :, 1]
        att = jnp.einsum('bnhd,bmhd->bnmh', q, k) * scale
        att = jax.nn.softmax(att, axis=2)
        o = jnp.einsum('bnmh,bmhd->bnhd', att, v).reshape(B, -1, D)
        o = o @ params["wproj"][l].astype(jnp.float32) + params["bproj"][l, 0]
        t = t + o
        xn2 = ln(t, params["ln2_w"][l, 0], params["ln2_b"][l, 0])
        m = (jax.nn.relu(xn2 @ params["w1"][l].astype(jnp.float32) + params["b1"][l, 0])
             @ params["w2"][l].astype(jnp.float32) + params["b2"][l, 0])
        t = t + m
    return t[:, clip_length:]


# ----------------------------------- main ------------------------------------

if __name__ == "__main__":
    B = 2
    dim_clip = 32
    dim_embedding = 32       # divisible by num_heads=8 -> head_dim=4
    prefix_length = 8
    clip_length = 8
    num_layers = 2           # small (default is 8) for a quick test
    num_heads = 8

    key = jax.random.PRNGKey(0)
    kx, kp = jax.random.split(key)
    x = jax.random.normal(kx, (B, dim_clip), jnp.float32)
    # Use param_dtype=jnp.bfloat16 in production (v5e/v6e/v7x) for ~2x MXU throughput
    # and half the weight HBM/VMEM traffic; f32 here for a tight numerical check.
    params = init_params(kp, dim_clip, dim_embedding, prefix_length,
                         clip_length, num_layers, num_heads,
                         param_dtype=jnp.float32)

    out = transformer_mapper_forward(params, x, clip_length, num_heads)
    out = jax.block_until_ready(out)
    assert out.shape == (B, prefix_length, dim_embedding), out.shape
    assert jnp.all(jnp.isfinite(out))

    ref = reference_forward(params, x, clip_length, num_heads)
    max_err = float(jnp.max(jnp.abs(out - ref)))
    assert max_err < 5e-2, f"mismatch vs reference: {max_err}"

    print("KERNEL_OK")
</pallas_src>

<mosaic_0001>
module attributes {stable_mosaic.version = 11 : i64} {
  func.func @_linear_bias_kernel(%arg0: i32, %arg1: memref<2x32xf32, #tpu.memory_space<vmem>>, %arg2: memref<32x256xf32, #tpu.memory_space<vmem>>, %arg3: memref<1x256xf32, #tpu.memory_space<vmem>>, %arg4: memref<2x256xf32, #tpu.memory_space<vmem>>) attributes {dimension_semantics = [#tpu.dimension_semantics<parallel>], iteration_bounds = array<i64: 1>, scalar_prefetch = 0 : i64, scratch_operands = 0 : i64, tpu.core_type = #tpu.core_type<tc>, window_params = [{pipeline_mode = #tpu.pipeline_mode<synchronous>, transform_indices = @transform_0, window_bounds = array<i64: 2, 32>}, {transform_indices = @transform_1, window_bounds = array<i64: 32, 256>}, {transform_indices = @transform_2, window_bounds = array<i64: 1, 256>}, {transform_indices = @transform_3, window_bounds = array<i64: 2, 256>}]} {
    %c0 = arith.constant 0 : index
    %c0_0 = arith.constant 0 : index
    %0 = vector.load %arg1[%c0, %c0_0] : memref<2x32xf32, #tpu.memory_space<vmem>>, vector<2x32xf32>
    %c0_1 = arith.constant 0 : index
    %c0_2 = arith.constant 0 : index
    %1 = vector.load %arg2[%c0_1, %c0_2] : memref<32x256xf32, #tpu.memory_space<vmem>>, vector<32x256xf32>
    %cst = arith.constant dense<0.000000e+00> : vector<2x256xf32>
    %2 = tpu.matmul %0, %1, %cst {dimension_numbers = #tpu.dot_dimension_numbers<[1], [0], [0], [1], [0, 0, 1, 1], [], []>} : vector<2x32xf32>, vector<32x256xf32>, vector<2x256xf32> -> vector<2x256xf32>
    %c0_3 = arith.constant 0 : index
    %c0_4 = arith.constant 0 : index
    %3 = vector.load %arg3[%c0_3, %c0_4] : memref<1x256xf32, #tpu.memory_space<vmem>>, vector<1x256xf32>
    %4 = vector.broadcast %3 : vector<1x256xf32> to vector<2x256xf32>
    %5 = arith.addf %2, %4 : vector<2x256xf32>
    %c0_5 = arith.constant 0 : index
    %c0_6 = arith.constant 0 : index
    %6 = vector.load %arg4[%c0_5, %c0_6] : memref<2x256xf32, #tpu.memory_space<vmem>>, vector<2x256xf32>
    tpu.vector_store %arg4[%c0_5, %c0_6], %5 {strides = array<i32>} : memref<2x256xf32, #tpu.memory_space<vmem>>, vector<2x256xf32>,
    return
  }
  func.func @transform_0(%arg0: i32) -> (i32, i32) {
    %c0_i32 = arith.constant 0 : i32
    %c0_i32_0 = arith.constant 0 : i32
    %c0_i32_1 = arith.constant 0 : i32
    return %c0_i32, %c0_i32_0 : i32, i32
  }
  func.func @transform_1(%arg0: i32) -> (i32, i32) {
    %c0_i32 = arith.constant 0 : i32
    %c0_i32_0 = arith.constant 0 : i32
    return %c0_i32, %arg0 : i32, i32
  }
  func.func @transform_2(%arg0: i32) -> (i32, i32) {
    %c0_i32 = arith.constant 0 : i32
    %c0_i32_0 = arith.constant 0 : i32
    return %c0_i32, %arg0 : i32, i32
  }
  func.func @transform_3(%arg0: i32) -> (i32, i32) {
    %c0_i32 = arith.constant 0 : i32
    %c0_i32_0 = arith.constant 0 : i32
    return %c0_i32, %arg0 : i32, i32
  }
}

</mosaic_0001>

<llo_original>
// kernel: tpu_custom_call.1
$region0: #{tpu_custom_call.1}
  #allocation0 [shape = 'u32[]', space=smem, size = 0x4, offset = 0x4, fixed_abs, tag = 'smem constant byte address 0x4 - core index']
  #allocation1 [shape = 'u32[144,128]{1,0:T(1,128)}', space=vmem, size = 0x12000, scoped, tag = 'internal scratch']
  %s0 = inlined_call_operand.hbm [shape: f32[2,32], index: 0, kind: input, shape index: {}]
  %s1 = inlined_call_operand.hbm [shape: f32[32,256], index: 1, kind: input, shape index: {}]
  %s2 = inlined_call_operand.vmem [shape: f32[1,256], index: 2, kind: input, shape index: {}]
  %s3 = inlined_call_operand.hbm [shape: f32[2,256], index: 3, kind: output, shape index: {}]
  %s4 = sld [smem:[#allocation0]]
  $region30: #{tpu_custom_call.1} parent=0
    _
  %s6 = ssub.s32 1, %s4
  %s7 = scalar_select 0, %s6, %s4
  $region1: #{tpu_custom_call.1} parent=0
    #allocation2 [shape = 'u8[1024]{0}', space=vmem, size = 0x400, scoped, tag = 'input window, operand 0, single buffered']
    #allocation3 [shape = 's32[1]{0}', space=sflag, size = 0x4, scoped, tag = 'scoped memory for tpu_custom_call.1']
    #allocation4 [shape = 's32[1]{0}', space=sflag, size = 0x4, scoped, tag = 'scoped memory for tpu_custom_call.1']
    #allocation5 [shape = 'u8[32768]{0}', space=vmem, size = 0x8000, scoped, tag = 'input window, operand 1, single buffered']
    #allocation6 [shape = 's32[1]{0}', space=sflag, size = 0x4, scoped, tag = 'scoped memory for tpu_custom_call.1']
    #allocation7 [shape = 'u8[2048]{0}', space=vmem, size = 0x800, scoped, tag = 'output window, operand 0, single buffered']
    %8 = vsyncpa [#allocation3], 0
    %9 = vsyncpa [#allocation6], 0
    %10 = vsyncpa [#allocation4], 0
    // Predicated region
    $region2: #{tpu_custom_call.1} parent=1 // pred_check
      _
    $region3: #{tpu_custom_call.1} parent=1 // pred_check_branch
      %12 = sbr.rel (0) target = $region5
    $region4: #{tpu_custom_call.1} parent=1 // pred_region
      %s14 = ssub.s32 32, 32
      %15 = vsyncadd [#allocation3], %s14
      %s17 = sshll.u32 [#allocation2], 4
      %s18 = int_to_ptr.vmem [resolvable:$true] %s17
      %20 = dma.hbm_to_vmem [thread:$0]  %s0, 32, %s18, [#allocation3]
    $region5: #{tpu_custom_call.1} parent=1 // pred_fallthru
      _
    // Predicated region
    $region6: #{tpu_custom_call.1} parent=1 // pred_check
      _
    $region7: #{tpu_custom_call.1} parent=1 // pred_check_branch
      %22 = sbr.rel (0) target = $region9
    $region8: #{tpu_custom_call.1} parent=1 // pred_region
      %s24 = ssub.s32 1024, 1024
      %25 = vsyncadd [#allocation6], %s24
      %s26 = sshll.u32 [#allocation5], 4
      %s27 = int_to_ptr.vmem [resolvable:$true] %s26
      %32 = dma.hbm_to_vmem [thread:$0]  %s1, 1024, %s27, [#allocation6], 256, 256, 16
    $region9: #{tpu_custom_call.1} parent=1 // pred_fallthru
      _
    // Predicated region
    $region10: #{tpu_custom_call.1} parent=1 // pred_check
      _
    $region11: #{tpu_custom_call.1} parent=1 // pred_check_branch
      %34 = sbr.rel (0) target = $region13
    $region12: #{tpu_custom_call.1} parent=1 // pred_region
      _
    $region13: #{tpu_custom_call.1} parent=1 // pred_fallthru
      _
    // Predicated region
    $region14: #{tpu_custom_call.1} parent=1 // pred_check
      _
    $region15: #{tpu_custom_call.1} parent=1 // pred_check_branch
      %36 = sbr.rel (0) target = $region17
    $region16: #{tpu_custom_call.1} parent=1 // pred_region
      %37 = dma.done [#allocation3], 32
    $region17: #{tpu_custom_call.1} parent=1 // pred_fallthru
      _
    // Predicated region
    $region18: #{tpu_custom_call.1} parent=1 // pred_check
      _
    $region19: #{tpu_custom_call.1} parent=1 // pred_check_branch
      %39 = sbr.rel (0) target = $region21
    $region20: #{tpu_custom_call.1} parent=1 // pred_region
      %40 = dma.done [#allocation6], 1024
    $region21: #{tpu_custom_call.1} parent=1 // pred_fallthru
      _
    %v41 = vld [vmem:[#allocation2] sm:$0x3]
    %v42 = vld [vmem:[#allocation5] sm:$0xff]
    %v43 = vld [vmem:[#allocation5 + $0x8] sm:$0xff]
    %v44 = vld [vmem:[#allocation5 + $0x10] sm:$0xff]
    %v45 = vld [vmem:[#allocation5 + $0x18] sm:$0xff]
    %v46 = vld [vmem:[#allocation5 + $0x20] sm:$0xff]
    %v47 = vld [vmem:[#allocation5 + $0x28] sm:$0xff]
    %v48 = vld [vmem:[#allocation5 + $0x30] sm:$0xff]
    %v49 = vld [vmem:[#allocation5 + $0x38] sm:$0xff]
    %v50 = vld [vmem:[%s2] sm:$0x3]
    %v52 = vlaneseq
    %v53 = vshrl.u32 %v52, 7
    %v54 = vsub.s32 0, %v53
    %v55 = vrot.slane %v50, %v54
    %v56 = vlaneseq
    %v57 = vshrl.u32 %v56, 7
    %v58 = vsub.s32 1, %v57
    %v59 = vrot.slane %v50, %v58
    %vm62 = vcmask 261120
    %v64 = vsel %vm62, %v41, 0
    %66 = vmatprep.subr.mxu0 %v43
    %67 = vmatpush1.msra.mxu0 %v42
    %68 = vmatprep.subr.mxu0 %v45
    %69 = vmatpush1.msra.mxu0 %v44
    %70 = vmatprep.subr.mxu0 %v47
    %71 = vmatpush1.msra.mxu0 %v46
    %72 = vmatprep.subr.mxu0 %v49
    %73 = vmatpush1.msra.mxu0 %v48
    %74 = vmatprep.subr.mxu0 0.0
    %75 = vmatpush1.msra.mxu0 0.0
    %76 = vmatprep.subr.mxu0 0.0
    %77 = vmatpush1.msra.mxu0 0.0
    %78 = vmatprep.subr.mxu0 0.0
    %79 = vmatpush1.msra.mxu0 0.0
    %80 = vmatprep.subr.mxu0 0.0
    %81 = vmatpush1.msra.mxu0 0.0
    %82 = vmatprep.subr.mxu0 0.0
    %83 = vmatpush1.msra.mxu0 0.0
    %84 = vmatprep.subr.mxu0 0.0
    %85 = vmatpush1.msra.mxu0 0.0
    %86 = vmatprep.subr.mxu0 0.0
    %87 = vmatpush1.msra.mxu0 0.0
    %88 = vmatprep.subr.mxu0 0.0
    %89 = vmatpush1.msra.mxu0 0.0
    %90 = vmatprep.subr.mxu0 0.0
    %91 = vmatpush1.msra.mxu0 0.0
    %92 = vmatprep.subr.mxu0 0.0
    %93 = vmatpush1.msra.mxu0 0.0
    %94 = vmatprep.subr.mxu0 0.0
    %95 = vmatpush1.msra.mxu0 0.0
    %96 = vmatprep.subr.mxu0 0.0
    %97 = vmatpush1.msra.mxu0 0.0
    %98 = vmatprep.subr.mxu0 0.0
    %99 = vmatpush1.msra.mxu0 0.0
    %100 = vmatprep.subr.mxu0 0.0
    %101 = vmatpush1.msra.mxu0 0.0
    %102 = vmatprep.subr.mxu0 0.0
    %103 = vmatpush1.msra.mxu0 0.0
    %104 = vmatprep.subr.mxu0 0.0
    %105 = vmatpush1.msra.mxu0 0.0
    %106 = vmatprep.subr.mxu0 0.0
    %107 = vmatpush1.msra.mxu0 0.0
    %108 = vmatprep.subr.mxu0 0.0
    %109 = vmatpush1.msra.mxu0 0.0
    %110 = vmatprep.subr.mxu0 0.0
    %111 = vmatpush1.msra.mxu0 0.0
    %112 = vmatprep.subr.mxu0 0.0
    %113 = vmatpush1.msra.mxu0 0.0
    %114 = vmatprep.subr.mxu0 0.0
    %115 = vmatpush1.msra.mxu0 0.0
    %116 = vmatprep.subr.mxu0 0.0
    %117 = vmatpush1.msra.mxu0 0.0
    %118 = vmatprep.subr.mxu0 0.0
    %119 = vmatpush1.msra.mxu0 0.0
    %120 = vmatprep.subr.mxu0 0.0
    %121 = vmatpush1.msra.mxu0 0.0
    %122 = vmatprep.subr.mxu0 0.0
    %123 = vmatpush1.msra.mxu0 0.0
    %124 = vmatprep.subr.mxu0 0.0
    %125 = vmatpush1.msra.mxu0 0.0
    %126 = vmatprep.subr.mxu0 0.0
    %127 = vmatpush1.msra.mxu0 0.0
    %128 = vmatprep.subr.mxu0 0.0
    %129 = vmatpush1.msra.mxu0 0.0
    %130 = vmatprep.mubr.f32.mxu0 0.0
    %131 = vmatmul.mubr.f32.gmra.mrb[0].mxu0 %v64
    %v132 = vpop.f32.mrb[0].mxu0
    %v133 = vadd.f32 %v55, %v132
    %v134 = vpop.f32.mrb[0].mxu0
    %v135 = vadd.f32 %v59, %v134
    %136 = vdwg.mxu0
    %v139 = vcombine.low %v133, %v135
    %v141 = vunpack.c.l.s4 1983009808
    %v142 = vunpack.c.0.s8 %v141
    %v143 = vlaneseq
    %v144 = vshrl.u32 %v143, 7
    %v145 = vsub.s32 %v142, %v144
    %v146 = vrot.slane %v139, %v145
    %148 = vst [vmem:[#allocation7] sm:$0xf] %v146
    // Predicated region
    $region22: #{tpu_custom_call.1} parent=1 // pred_check
      _
    $region23: #{tpu_custom_call.1} parent=1 // pred_check_branch
      %150 = sbr.rel (0) target = $region25
    $region24: #{tpu_custom_call.1} parent=1 // pred_region
      %s152 = ssub.s32 64, 64
      %153 = vsyncadd [#allocation4], %s152
      %s155 = sshll.u32 [#allocation7], 4
      %s156 = int_to_ptr.vmem [resolvable:$true] %s155
      %158 = dma.vmem_to_hbm [thread:$0]  %s156, 64, %s3, [#allocation4]
    $region25: #{tpu_custom_call.1} parent=1 // pred_fallthru
      _
    // Predicated region
    $region26: #{tpu_custom_call.1} parent=1 // pred_check
      _
    $region27: #{tpu_custom_call.1} parent=1 // pred_check_branch
      %160 = sbr.rel (0) target = $region29
    $region28: #{tpu_custom_call.1} parent=1 // pred_region
      %161 = dma.done [#allocation4], 64
    $region29: #{tpu_custom_call.1} parent=1 // pred_fallthru
      _
    %162 = vsyncpa [#allocation3], 1
    %163 = vsyncpa [#allocation6], 1
    %164 = vsyncpa [#allocation4], 1

</llo_original>
